<compile_context>
chip_gen: v7x
topology: tpu7x:2x2x1
jax: 0.10.0
libtpu: 0.0.40
codegen_flags: <defaults>
</compile_context>

<pallas_src>
import functools

import jax
import jax.numpy as jnp
from jax.experimental import pallas as pl
from jax.experimental.pallas import tpu as pltpu


# ----------------------------- Pallas kernel ------------------------------- #
def _make_temporal_block_kernel(ksize, dilation, pad, tl, has_downsample):
    """Builds the fused TemporalBlock kernel for one (batch, L-tile) grid step.

    Refs (in order):
      x_ref   : (1, Cin, TL)        current input tile (NCL layout)
      w1_ref  : (K, Cout, Cin)      weight-normed conv1 weight, per tap
      b1_ref  : (Cout, 1)
      w2_ref  : (K, Cout, Cout)     weight-normed conv2 weight, per tap
      b2_ref  : (Cout, 1)
      [wd_ref : (Cout, Cin)]        downsample 1x1 weight  (only if Cin != Cout)
      [bd_ref : (Cout, 1)]
      out_ref : (1, Cout, TL)
      xw_ref  : (Cin, TL + pad)     VMEM carry: [pad cols causal history | x tile]
      h1w_ref : (Cout, TL + pad)    VMEM carry: [pad cols causal history | h1 tile]
    """

    def kernel(x_ref, w1_ref, b1_ref, w2_ref, b2_ref, *rest):
        if has_downsample:
            wd_ref, bd_ref, out_ref, xw_ref, h1w_ref = rest
        else:
            out_ref, xw_ref, h1w_ref = rest

        j = pl.program_id(1)
        cout = w1_ref.shape[1]

        # Causal zero history at the start of each sequence (tile j == 0).
        if pad > 0:
            @pl.when(j == 0)
            def _():
                xw_ref[:, :pad] = jnp.zeros((xw_ref.shape[0], pad), xw_ref.dtype)
                h1w_ref[:, :pad] = jnp.zeros((h1w_ref.shape[0], pad), h1w_ref.dtype)

        x_blk = x_ref[0]                      # (Cin, TL)
        xw_ref[:, pad:] = x_blk               # stage current tile after history

        # ---- conv1 (causal, dilated) + bias + ReLU ----------------------- #
        acc1 = jnp.zeros((cout, tl), jnp.float32)
        for k in range(ksize):                # small static tap loop
            xs = xw_ref[:, k * dilation: k * dilation + tl]      # (Cin, TL)
            acc1 = acc1 + jnp.dot(w1_ref[k], xs,
                                  preferred_element_type=jnp.float32)
        h1 = jnp.maximum(acc1 + b1_ref[...], 0.0)
        # dropout1: identity (inference)
        # TODO(synk): training-mode dropout would need pltpu.prng_seed/prng_random_bits.

        h1w_ref[:, pad:] = h1

        # ---- conv2 (causal, dilated) + bias + ReLU ----------------------- #
        acc2 = jnp.zeros((cout, tl), jnp.float32)
        for k in range(ksize):
            hs = h1w_ref[:, k * dilation: k * dilation + tl]     # (Cout, TL)
            acc2 = acc2 + jnp.dot(w2_ref[k], hs,
                                  preferred_element_type=jnp.float32)
        h2 = jnp.maximum(acc2 + b2_ref[...], 0.0)
        # dropout2: identity (inference)

        # ---- residual branch + final ReLU --------------------------------- #
        if has_downsample:
            res = jnp.dot(wd_ref[...], x_blk,
                          preferred_element_type=jnp.float32) + bd_ref[...]
        else:
            res = x_blk                        # identity residual: no matmul

        out_ref[0] = jnp.maximum(h2 + res, 0.0)

        # Carry the last `pad` columns as causal history for the next L-tile.
        if pad > 0:
            xw_ref[:, :pad] = xw_ref[:, tl:tl + pad]
            h1w_ref[:, :pad] = h1w_ref[:, tl:tl + pad]

    return kernel


# ------------------------------- wrapper ----------------------------------- #
def _apply_weight_norm(v, g):
    # PyTorch weight_norm, dim=0: w[o] = g[o] * v[o] / ||v[o]||_2
    norm = jnp.sqrt(jnp.sum(v * v, axis=(1, 2), keepdims=True))
    return g[:, None, None] * v / norm


def temporal_block_forward(x, params, *, kernel_size, dilation, padding,
                           l_tile=512):
    """x: (B, Cin, L) float32 (PyTorch NCL). Returns (B, Cout, L)."""
    B, Cin, L = x.shape
    if padding != (kernel_size - 1) * dilation:
        raise ValueError("TemporalBlock kernel assumes causal TCN padding "
                         "padding == (kernel_size - 1) * dilation")

    w1 = _apply_weight_norm(params['v1'], params['g1'])      # (Cout, Cin, K)
    w2 = _apply_weight_norm(params['v2'], params['g2'])      # (Cout, Cout, K)
    Cout = w1.shape[0]

    has_ds = params.get('wd', None) is not None
    if not has_ds:
        assert Cin == Cout, "identity residual requires Cin == Cout"

    # Weights as (K, Cout, Cin/out): each tap is one (Cout,C)@(C,TL) matmul.
    w1_k = jnp.transpose(w1, (2, 0, 1))                       # (K, Cout, Cin)
    w2_k = jnp.transpose(w2, (2, 0, 1))                       # (K, Cout, Cout)
    b1 = params['b1'].reshape(Cout, 1)
    b2 = params['b2'].reshape(Cout, 1)

    pad = padding
    # ---- pick an L tile: lane-dense (x128) when actually tiling ----------- #
    tl = int(min(l_tile, L))
    tl = max(tl, pad, 1)                       # carry copy needs pad <= TL
    if tl < L:
        tl = ((tl + 127) // 128) * 128         # keep tiled lane dim 128-aligned
    n_l = -(-L // tl)
    L_round = n_l * tl
    x_in = x if L_round == L else jnp.pad(x, ((0, 0), (0, 0), (0, L_round - L)))

    # ---- VMEM budget (explicit, fits v7x's 64 MiB) ------------------------ #
    vmem_est = 4 * (
        2 * Cin * tl + 2 * Cout * tl                         # dbl-buffered x/out
        + (Cin + Cout) * (tl + pad)                          # carry scratch
        + 2 * (kernel_size * Cout * (Cin + Cout)             # weights
               + 3 * Cout + Cout * Cin)                      # biases / 1x1
        + 6 * Cout * tl + 2 * Cin * tl                       # f32 intermediates
    )
    vmem_limit = int(min(64 * 1024 * 1024, max(16 * 1024 * 1024, 2 * vmem_est)))

    args = [x_in, w1_k, b1, w2_k, b2]
    in_specs = [
        pl.BlockSpec((1, Cin, tl), lambda b, j: (b, 0, j)),
        pl.BlockSpec((kernel_size, Cout, Cin), lambda b, j: (0, 0, 0)),
        pl.BlockSpec((Cout, 1), lambda b, j: (0, 0)),
        pl.BlockSpec((kernel_size, Cout, Cout), lambda b, j: (0, 0, 0)),
        pl.BlockSpec((Cout, 1), lambda b, j: (0, 0)),
    ]
    if has_ds:
        args += [params['wd'][:, :, 0], params['bd'].reshape(Cout, 1)]
        in_specs += [pl.BlockSpec((Cout, Cin), lambda b, j: (0, 0)),
                     pl.BlockSpec((Cout, 1), lambda b, j: (0, 0))]

    kernel = _make_temporal_block_kernel(kernel_size, dilation, pad, tl, has_ds)

    out = pl.pallas_call(
        kernel,
        out_shape=jax.ShapeDtypeStruct((B, Cout, L_round), jnp.float32),
        grid=(B, n_l),
        in_specs=in_specs,
        out_specs=pl.BlockSpec((1, Cout, tl), lambda b, j: (b, 0, j)),
        scratch_shapes=[pltpu.VMEM((Cin, tl + pad), jnp.float32),
                        pltpu.VMEM((Cout, tl + pad), jnp.float32)],
        compiler_params=pltpu.CompilerParams(
            dimension_semantics=("parallel", "arbitrary"),
            vmem_limit_bytes=vmem_limit),
    )(*args)

    return out if L_round == L else out[:, :, :L]


# ----------------------- pure-JAX reference (NCL) --------------------------- #
def _ref_conv1d(x, w, b, pad, dil):
    y = jax.lax.conv_general_dilated(
        x, w, window_strides=(1,), padding=[(pad, pad)], rhs_dilation=(dil,),
        dimension_numbers=('NCH', 'OIH', 'NCH'))
    return y + b[None, :, None]


def temporal_block_reference(x, params, *, kernel_size, dilation, padding):
    w1 = _apply_weight_norm(params['v1'], params['g1'])
    w2 = _apply_weight_norm(params['v2'], params['g2'])
    h = _ref_conv1d(x, w1, params['b1'], padding, dilation)
    if padding > 0:
        h = h[:, :, :-padding]
    h = jnp.maximum(h, 0.0)
    h = _ref_conv1d(h, w2, params['b2'], padding, dilation)
    if padding > 0:
        h = h[:, :, :-padding]
    h = jnp.maximum(h, 0.0)
    if params.get('wd', None) is not None:
        res = _ref_conv1d(x, params['wd'], params['bd'], 0, 1)
    else:
        res = x
    return jnp.maximum(h + res, 0.0)


# --------------------------------- main ------------------------------------ #
if __name__ == "__main__":
    def make_params(key, cin, cout, K, with_downsample):
        ks = jax.random.split(key, 8)
        return {
            'v1': 0.01 * jax.random.normal(ks[0], (cout, cin, K), jnp.float32),
            'g1': 0.5 + jax.random.uniform(ks[1], (cout,), jnp.float32),
            'b1': 0.1 * jax.random.normal(ks[2], (cout,), jnp.float32),
            'v2': 0.01 * jax.random.normal(ks[3], (cout, cout, K), jnp.float32),
            'g2': 0.5 + jax.random.uniform(ks[4], (cout,), jnp.float32),
            'b2': 0.1 * jax.random.normal(ks[5], (cout,), jnp.float32),
            'wd': (0.01 * jax.random.normal(ks[6], (cout, cin, 1), jnp.float32)
                   if with_downsample else None),
            'bd': (0.1 * jax.random.normal(ks[7], (cout,), jnp.float32)
                   if with_downsample else None),
        }

    key = jax.random.PRNGKey(0)
    k1, k2, kx1, kx2 = jax.random.split(key, 4)

    # Config A: Cin != Cout (downsample residual), multi-tile L with crop.
    B, Cin, Cout, L, K, dil = 2, 4, 8, 300, 3, 2
    pad = (K - 1) * dil
    pA = make_params(k1, Cin, Cout, K, True)
    xA = jax.random.normal(kx1, (B, Cin, L), jnp.float32)
    outA = temporal_block_forward(xA, pA, kernel_size=K, dilation=dil,
                                  padding=pad, l_tile=128)
    outA = jax.block_until_ready(outA)
    refA = temporal_block_reference(xA, pA, kernel_size=K, dilation=dil,
                                    padding=pad)
    assert outA.shape == (B, Cout, L)
    assert jnp.allclose(outA, refA, atol=1e-4, rtol=1e-4), "config A mismatch"

    # Config B: Cin == Cout (identity residual), single tile.
    B2, C2, L2, K2, dil2 = 2, 8, 16, 3, 1
    pad2 = (K2 - 1) * dil2
    pB = make_params(k2, C2, C2, K2, False)
    xB = jax.random.normal(kx2, (B2, C2, L2), jnp.float32)
    outB = temporal_block_forward(xB, pB, kernel_size=K2, dilation=dil2,
                                  padding=pad2)
    outB = jax.block_until_ready(outB)
    refB = temporal_block_reference(xB, pB, kernel_size=K2, dilation=dil2,
                                    padding=pad2)
    assert outB.shape == (B2, C2, L2)
    assert jnp.allclose(outB, refB, atol=1e-4, rtol=1e-4), "config B mismatch"

    print("KERNEL_OK")
</pallas_src>

<mosaic_0001>
module attributes {stable_mosaic.version = 11 : i64} {
  func.func @kernel(%arg0: i32, %arg1: i32, %arg2: memref<1x4x128xf32, #tpu.memory_space<vmem>>, %arg3: memref<3x8x4xf32, #tpu.memory_space<vmem>>, %arg4: memref<8x1xf32, #tpu.memory_space<vmem>>, %arg5: memref<3x8x8xf32, #tpu.memory_space<vmem>>, %arg6: memref<8x1xf32, #tpu.memory_space<vmem>>, %arg7: memref<8x4xf32, #tpu.memory_space<vmem>>, %arg8: memref<8x1xf32, #tpu.memory_space<vmem>>, %arg9: memref<1x8x128xf32, #tpu.memory_space<vmem>>, %arg10: memref<4x132xf32, #tpu.memory_space<vmem>>, %arg11: memref<8x132xf32, #tpu.memory_space<vmem>>) attributes {dimension_semantics = [#tpu.dimension_semantics<parallel>, #tpu.dimension_semantics<arbitrary>], iteration_bounds = array<i64: 2, 3>, scalar_prefetch = 0 : i64, scratch_operands = 2 : i64, tpu.core_type = #tpu.core_type<tc>, window_params = [{transform_indices = @transform_0, window_bounds = array<i64: 1, 4, 128>}, {pipeline_mode = #tpu.pipeline_mode<synchronous>, transform_indices = @transform_1, window_bounds = array<i64: 3, 8, 4>}, {pipeline_mode = #tpu.pipeline_mode<synchronous>, transform_indices = @transform_2, window_bounds = array<i64: 8, 1>}, {pipeline_mode = #tpu.pipeline_mode<synchronous>, transform_indices = @transform_3, window_bounds = array<i64: 3, 8, 8>}, {pipeline_mode = #tpu.pipeline_mode<synchronous>, transform_indices = @transform_4, window_bounds = array<i64: 8, 1>}, {pipeline_mode = #tpu.pipeline_mode<synchronous>, transform_indices = @transform_5, window_bounds = array<i64: 8, 4>}, {pipeline_mode = #tpu.pipeline_mode<synchronous>, transform_indices = @transform_6, window_bounds = array<i64: 8, 1>}, {transform_indices = @transform_7, window_bounds = array<i64: 1, 8, 128>}]} {
    %c0_i32 = arith.constant 0 : i32
    %0 = arith.cmpi eq, %arg1, %c0_i32 : i32
    %1 = arith.extui %0 : i1 to i32
    %c0_i32_0 = arith.constant 0 : i32
    %2 = arith.cmpi ne, %1, %c0_i32_0 : i32
    scf.if %2 {
      %cst_63 = arith.constant 0.000000e+00 : f32
      %64 = vector.broadcast %cst_63 : f32 to vector<4x4xf32>
      %c0_64 = arith.constant 0 : index
      %c0_65 = arith.constant 0 : index
      %65 = vector.load %arg10[%c0_64, %c0_65] : memref<4x132xf32, #tpu.memory_space<vmem>>, vector<4x4xf32>
      tpu.vector_store %arg10[%c0_64, %c0_65], %64 {strides = array<i32>} : memref<4x132xf32, #tpu.memory_space<vmem>>, vector<4x4xf32>,
      %cst_66 = arith.constant 0.000000e+00 : f32
      %66 = vector.broadcast %cst_66 : f32 to vector<8x4xf32>
      %c0_67 = arith.constant 0 : index
      %c0_68 = arith.constant 0 : index
      %67 = vector.load %arg11[%c0_67, %c0_68] : memref<8x132xf32, #tpu.memory_space<vmem>>, vector<8x4xf32>
      tpu.vector_store %arg11[%c0_67, %c0_68], %66 {strides = array<i32>} : memref<8x132xf32, #tpu.memory_space<vmem>>, vector<8x4xf32>,
    } else {
    }
    %c0 = arith.constant 0 : index
    %c0_1 = arith.constant 0 : index
    %c0_2 = arith.constant 0 : index
    %3 = vector.load %arg2[%c0, %c0_1, %c0_2] : memref<1x4x128xf32, #tpu.memory_space<vmem>>, vector<1x4x128xf32>
    %4 = vector.shape_cast %3 : vector<1x4x128xf32> to vector<4x128xf32>
    %c0_3 = arith.constant 0 : index
    %c4 = arith.constant 4 : index
    %5 = vector.load %arg10[%c0_3, %c4] : memref<4x132xf32, #tpu.memory_space<vmem>>, vector<4x128xf32>
    tpu.vector_store %arg10[%c0_3, %c4], %4 {strides = array<i32>} : memref<4x132xf32, #tpu.memory_space<vmem>>, vector<4x128xf32>,
    %cst = arith.constant 0.000000e+00 : f32
    %6 = vector.broadcast %cst : f32 to vector<8x128xf32>
    %c0_4 = arith.constant 0 : index
    %c0_5 = arith.constant 0 : index
    %7 = vector.load %arg10[%c0_4, %c0_5] : memref<4x132xf32, #tpu.memory_space<vmem>>, vector<4x128xf32>
    %c0_6 = arith.constant 0 : index
    %c0_7 = arith.constant 0 : index
    %c0_8 = arith.constant 0 : index
    %8 = vector.load %arg3[%c0_6, %c0_7, %c0_8] : memref<3x8x4xf32, #tpu.memory_space<vmem>>, vector<1x8x4xf32>
    %9 = vector.shape_cast %8 : vector<1x8x4xf32> to vector<8x4xf32>
    %cst_9 = arith.constant dense<0.000000e+00> : vector<8x128xf32>
    %10 = tpu.matmul %9, %7, %cst_9 {dimension_numbers = #tpu.dot_dimension_numbers<[1], [0], [0], [1], [0, 0, 1, 1], [], []>} : vector<8x4xf32>, vector<4x128xf32>, vector<8x128xf32> -> vector<8x128xf32>
    %11 = arith.addf %6, %10 : vector<8x128xf32>
    %c0_10 = arith.constant 0 : index
    %c2 = arith.constant 2 : index
    %12 = vector.load %arg10[%c0_10, %c2] : memref<4x132xf32, #tpu.memory_space<vmem>>, vector<4x128xf32>
    %c1 = arith.constant 1 : index
    %c0_11 = arith.constant 0 : index
    %c0_12 = arith.constant 0 : index
    %13 = vector.load %arg3[%c1, %c0_11, %c0_12] : memref<3x8x4xf32, #tpu.memory_space<vmem>>, vector<1x8x4xf32>
    %14 = vector.shape_cast %13 : vector<1x8x4xf32> to vector<8x4xf32>
    %cst_13 = arith.constant dense<0.000000e+00> : vector<8x128xf32>
    %15 = tpu.matmul %14, %12, %cst_13 {dimension_numbers = #tpu.dot_dimension_numbers<[1], [0], [0], [1], [0, 0, 1, 1], [], []>} : vector<8x4xf32>, vector<4x128xf32>, vector<8x128xf32> -> vector<8x128xf32>
    %16 = arith.addf %11, %15 : vector<8x128xf32>
    %c0_14 = arith.constant 0 : index
    %c4_15 = arith.constant 4 : index
    %17 = vector.load %arg10[%c0_14, %c4_15] : memref<4x132xf32, #tpu.memory_space<vmem>>, vector<4x128xf32>
    %c2_16 = arith.constant 2 : index
    %c0_17 = arith.constant 0 : index
    %c0_18 = arith.constant 0 : index
    %18 = vector.load %arg3[%c2_16, %c0_17, %c0_18] : memref<3x8x4xf32, #tpu.memory_space<vmem>>, vector<1x8x4xf32>
    %19 = vector.shape_cast %18 : vector<1x8x4xf32> to vector<8x4xf32>
    %cst_19 = arith.constant dense<0.000000e+00> : vector<8x128xf32>
    %20 = tpu.matmul %19, %17, %cst_19 {dimension_numbers = #tpu.dot_dimension_numbers<[1], [0], [0], [1], [0, 0, 1, 1], [], []>} : vector<8x4xf32>, vector<4x128xf32>, vector<8x128xf32> -> vector<8x128xf32>
    %21 = arith.addf %16, %20 : vector<8x128xf32>
    %c0_20 = arith.constant 0 : index
    %c0_21 = arith.constant 0 : index
    %22 = vector.load %arg4[%c0_20, %c0_21] : memref<8x1xf32, #tpu.memory_space<vmem>>, vector<8x1xf32>
    %23 = vector.broadcast %22 : vector<8x1xf32> to vector<8x128xf32>
    %24 = arith.addf %21, %23 : vector<8x128xf32>
    %cst_22 = arith.constant 0.000000e+00 : f32
    %25 = vector.broadcast %cst_22 : f32 to vector<8x128xf32>
    %26 = arith.maximumf %24, %25 : vector<8x128xf32>
    %c0_23 = arith.constant 0 : index
    %c4_24 = arith.constant 4 : index
    %27 = vector.load %arg11[%c0_23, %c4_24] : memref<8x132xf32, #tpu.memory_space<vmem>>, vector<8x128xf32>
    tpu.vector_store %arg11[%c0_23, %c4_24], %26 {strides = array<i32>} : memref<8x132xf32, #tpu.memory_space<vmem>>, vector<8x128xf32>,
    %cst_25 = arith.constant 0.000000e+00 : f32
    %28 = vector.broadcast %cst_25 : f32 to vector<8x128xf32>
    %c0_26 = arith.constant 0 : index
    %c0_27 = arith.constant 0 : index
    %29 = vector.load %arg11[%c0_26, %c0_27] : memref<8x132xf32, #tpu.memory_space<vmem>>, vector<8x128xf32>
    %c0_28 = arith.constant 0 : index
    %c0_29 = arith.constant 0 : index
    %c0_30 = arith.constant 0 : index
    %30 = vector.load %arg5[%c0_28, %c0_29, %c0_30] : memref<3x8x8xf32, #tpu.memory_space<vmem>>, vector<1x8x8xf32>
    %31 = vector.shape_cast %30 : vector<1x8x8xf32> to vector<8x8xf32>
    %cst_31 = arith.constant dense<0.000000e+00> : vector<8x128xf32>
    %32 = tpu.matmul %31, %29, %cst_31 {dimension_numbers = #tpu.dot_dimension_numbers<[1], [0], [0], [1], [0, 0, 1, 1], [], []>} : vector<8x8xf32>, vector<8x128xf32>, vector<8x128xf32> -> vector<8x128xf32>
    %33 = arith.addf %28, %32 : vector<8x128xf32>
    %c0_32 = arith.constant 0 : index
    %c2_33 = arith.constant 2 : index
    %34 = vector.load %arg11[%c0_32, %c2_33] : memref<8x132xf32, #tpu.memory_space<vmem>>, vector<8x128xf32>
    %c1_34 = arith.constant 1 : index
    %c0_35 = arith.constant 0 : index
    %c0_36 = arith.constant 0 : index
    %35 = vector.load %arg5[%c1_34, %c0_35, %c0_36] : memref<3x8x8xf32, #tpu.memory_space<vmem>>, vector<1x8x8xf32>
    %36 = vector.shape_cast %35 : vector<1x8x8xf32> to vector<8x8xf32>
    %cst_37 = arith.constant dense<0.000000e+00> : vector<8x128xf32>
    %37 = tpu.matmul %36, %34, %cst_37 {dimension_numbers = #tpu.dot_dimension_numbers<[1], [0], [0], [1], [0, 0, 1, 1], [], []>} : vector<8x8xf32>, vector<8x128xf32>, vector<8x128xf32> -> vector<8x128xf32>
    %38 = arith.addf %33, %37 : vector<8x128xf32>
    %c0_38 = arith.constant 0 : index
    %c4_39 = arith.constant 4 : index
    %39 = vector.load %arg11[%c0_38, %c4_39] : memref<8x132xf32, #tpu.memory_space<vmem>>, vector<8x128xf32>
    %c2_40 = arith.constant 2 : index
    %c0_41 = arith.constant 0 : index
    %c0_42 = arith.constant 0 : index
    %40 = vector.load %arg5[%c2_40, %c0_41, %c0_42] : memref<3x8x8xf32, #tpu.memory_space<vmem>>, vector<1x8x8xf32>
    %41 = vector.shape_cast %40 : vector<1x8x8xf32> to vector<8x8xf32>
    %cst_43 = arith.constant dense<0.000000e+00> : vector<8x128xf32>
    %42 = tpu.matmul %41, %39, %cst_43 {dimension_numbers = #tpu.dot_dimension_numbers<[1], [0], [0], [1], [0, 0, 1, 1], [], []>} : vector<8x8xf32>, vector<8x128xf32>, vector<8x128xf32> -> vector<8x128xf32>
    %43 = arith.addf %38, %42 : vector<8x128xf32>
    %c0_44 = arith.constant 0 : index
    %c0_45 = arith.constant 0 : index
    %44 = vector.load %arg6[%c0_44, %c0_45] : memref<8x1xf32, #tpu.memory_space<vmem>>, vector<8x1xf32>
    %45 = vector.broadcast %44 : vector<8x1xf32> to vector<8x128xf32>
    %46 = arith.addf %43, %45 : vector<8x128xf32>
    %cst_46 = arith.constant 0.000000e+00 : f32
    %47 = vector.broadcast %cst_46 : f32 to vector<8x128xf32>
    %48 = arith.maximumf %46, %47 : vector<8x128xf32>
    %c0_47 = arith.constant 0 : index
    %c0_48 = arith.constant 0 : index
    %49 = vector.load %arg7[%c0_47, %c0_48] : memref<8x4xf32, #tpu.memory_space<vmem>>, vector<8x4xf32>
    %cst_49 = arith.constant dense<0.000000e+00> : vector<8x128xf32>
    %50 = tpu.matmul %49, %4, %cst_49 {dimension_numbers = #tpu.dot_dimension_numbers<[1], [0], [0], [1], [0, 0, 1, 1], [], []>} : vector<8x4xf32>, vector<4x128xf32>, vector<8x128xf32> -> vector<8x128xf32>
    %c0_50 = arith.constant 0 : index
    %c0_51 = arith.constant 0 : index
    %51 = vector.load %arg8[%c0_50, %c0_51] : memref<8x1xf32, #tpu.memory_space<vmem>>, vector<8x1xf32>
    %52 = vector.broadcast %51 : vector<8x1xf32> to vector<8x128xf32>
    %53 = arith.addf %50, %52 : vector<8x128xf32>
    %54 = arith.addf %48, %53 : vector<8x128xf32>
    %cst_52 = arith.constant 0.000000e+00 : f32
    %55 = vector.broadcast %cst_52 : f32 to vector<8x128xf32>
    %56 = arith.maximumf %54, %55 : vector<8x128xf32>
    %c0_53 = arith.constant 0 : index
    %c0_54 = arith.constant 0 : index
    %c0_55 = arith.constant 0 : index
    %57 = vector.load %arg9[%c0_53, %c0_54, %c0_55] : memref<1x8x128xf32, #tpu.memory_space<vmem>>, vector<1x8x128xf32>
    %58 = vector.shape_cast %57 : vector<1x8x128xf32> to vector<8x128xf32>
    %59 = vector.shape_cast %56 : vector<8x128xf32> to vector<1x8x128xf32>
    tpu.vector_store %arg9[%c0_53, %c0_54, %c0_55], %59 {strides = array<i32>} : memref<1x8x128xf32, #tpu.memory_space<vmem>>, vector<1x8x128xf32>,
    %c0_56 = arith.constant 0 : index
    %c128 = arith.constant 128 : index
    %60 = vector.load %arg10[%c0_56, %c128] : memref<4x132xf32, #tpu.memory_space<vmem>>, vector<4x4xf32>
    %c0_57 = arith.constant 0 : index
    %c0_58 = arith.constant 0 : index
    %61 = vector.load %arg10[%c0_57, %c0_58] : memref<4x132xf32, #tpu.memory_space<vmem>>, vector<4x4xf32>
    tpu.vector_store %arg10[%c0_57, %c0_58], %60 {strides = array<i32>} : memref<4x132xf32, #tpu.memory_space<vmem>>, vector<4x4xf32>,
    %c0_59 = arith.constant 0 : index
    %c128_60 = arith.constant 128 : index
    %62 = vector.load %arg11[%c0_59, %c128_60] : memref<8x132xf32, #tpu.memory_space<vmem>>, vector<8x4xf32>
    %c0_61 = arith.constant 0 : index
    %c0_62 = arith.constant 0 : index
    %63 = vector.load %arg11[%c0_61, %c0_62] : memref<8x132xf32, #tpu.memory_space<vmem>>, vector<8x4xf32>
    tpu.vector_store %arg11[%c0_61, %c0_62], %62 {strides = array<i32>} : memref<8x132xf32, #tpu.memory_space<vmem>>, vector<8x4xf32>,
    return
  }
  func.func @transform_0(%arg0: i32, %arg1: i32) -> (i32, i32, i32) {
    %c0_i32 = arith.constant 0 : i32
    %c0_i32_0 = arith.constant 0 : i32
    return %arg0, %c0_i32, %arg1 : i32, i32, i32
  }
  func.func @transform_1(%arg0: i32, %arg1: i32) -> (i32, i32, i32) {
    %c0_i32 = arith.constant 0 : i32
    %c0_i32_0 = arith.constant 0 : i32
    %c0_i32_1 = arith.constant 0 : i32
    %c0_i32_2 = arith.constant 0 : i32
    return %c0_i32, %c0_i32_0, %c0_i32_1 : i32, i32, i32
  }
  func.func @transform_2(%arg0: i32, %arg1: i32) -> (i32, i32) {
    %c0_i32 = arith.constant 0 : i32
    %c0_i32_0 = arith.constant 0 : i32
    %c0_i32_1 = arith.constant 0 : i32
    return %c0_i32, %c0_i32_0 : i32, i32
  }
  func.func @transform_3(%arg0: i32, %arg1: i32) -> (i32, i32, i32) {
    %c0_i32 = arith.constant 0 : i32
    %c0_i32_0 = arith.constant 0 : i32
    %c0_i32_1 = arith.constant 0 : i32
    %c0_i32_2 = arith.constant 0 : i32
    return %c0_i32, %c0_i32_0, %c0_i32_1 : i32, i32, i32
  }
  func.func @transform_4(%arg0: i32, %arg1: i32) -> (i32, i32) {
    %c0_i32 = arith.constant 0 : i32
    %c0_i32_0 = arith.constant 0 : i32
    %c0_i32_1 = arith.constant 0 : i32
    return %c0_i32, %c0_i32_0 : i32, i32
  }
  func.func @transform_5(%arg0: i32, %arg1: i32) -> (i32, i32) {
    %c0_i32 = arith.constant 0 : i32
    %c0_i32_0 = arith.constant 0 : i32
    %c0_i32_1 = arith.constant 0 : i32
    return %c0_i32, %c0_i32_0 : i32, i32
  }
  func.func @transform_6(%arg0: i32, %arg1: i32) -> (i32, i32) {
    %c0_i32 = arith.constant 0 : i32
    %c0_i32_0 = arith.constant 0 : i32
    %c0_i32_1 = arith.constant 0 : i32
    return %c0_i32, %c0_i32_0 : i32, i32
  }
  func.func @transform_7(%arg0: i32, %arg1: i32) -> (i32, i32, i32) {
    %c0_i32 = arith.constant 0 : i32
    %c0_i32_0 = arith.constant 0 : i32
    return %arg0, %c0_i32, %arg1 : i32, i32, i32
  }
}

</mosaic_0001>

<llo_original>
// kernel: tpu_custom_call.1
$region0: #{tpu_custom_call.1}
  #allocation0 [shape = 'u32[]', space=smem, size = 0x4, offset = 0x4, fixed_abs, tag = 'smem constant byte address 0x4 - core index']
  #allocation1 [shape = 'u32[144,128]{1,0:T(1,128)}', space=vmem, size = 0x12000, scoped, tag = 'internal scratch']
  #allocation2 [shape = 'f32[4,132]{1,0:T(4,128)}', space=vmem, size = 0x1000, scoped, tag = 'scratch operand']
  #allocation3 [shape = 'f32[8,132]{1,0:T(8,128)}', space=vmem, size = 0x2000, scoped, tag = 'scratch operand']
  %s0 = inlined_call_operand.vmem [shape: f32[2,4,384], index: 0, kind: input, shape index: {}]
  %s1 = inlined_call_operand.vmem [shape: f32[3,8,4], index: 1, kind: input, shape index: {}]
  %s2 = inlined_call_operand.vmem [shape: f32[8,1], index: 2, kind: input, shape index: {}]
  %s3 = inlined_call_operand.vmem [shape: f32[3,8,8], index: 3, kind: input, shape index: {}]
  %s4 = inlined_call_operand.vmem [shape: f32[8,1], index: 4, kind: input, shape index: {}]
  %s5 = inlined_call_operand.vmem [shape: f32[8,4], index: 5, kind: input, shape index: {}]
  %s6 = inlined_call_operand.vmem [shape: f32[8,1], index: 6, kind: input, shape index: {}]
  %s7 = inlined_call_operand.hbm [shape: f32[2,8,384], index: 7, kind: output, shape index: {}]
  %s8 = sld [smem:[#allocation0]]
  $region65: #{tpu_custom_call.1} parent=0
    _
  %s10 = ssub.s32 1, %s8
  %s11 = scalar_select 0, %s10, %s8
  $region1: #{tpu_custom_call.1} parent=0
    #allocation4 [shape = 'u8[8192]{0}', space=vmem, size = 0x2000, scoped, tag = 'output window, operand 0']
    #allocation5 [shape = 's32[2]{0}', space=sflag, size = 0x8, scoped, tag = 'scoped memory for tpu_custom_call.1']
    %12 = vsyncpa [#allocation5], 0
    %s13 = scalar_lea.sflag [#allocation5], 1
    %14 = vsyncpa %s13, 0
    loop: start=0, step=1, limit=8
    $region2: #{tpu_custom_call.1} parent=1 // loop_pre_header
      _
    $region3: #{tpu_custom_call.1} parent=1 // loop_header
      %s16 = sphi 0, %s20
      %p17 = scmp.ge.s32.totalorder %s16, 8
      %s23 = sphi 0, %s35
      %s24 = sphi 0, %s31
      %s25 = sphi 0, %s23
      %s26 = sphi 0, %s24
      %s27 = sphi 0, %s25
      %s28 = sphi 0, %s26
      %s40 = sphi 0, %s42
      %s43 = sphi 0, %s40
      %s44 = sphi 0, %s43
      %s60 = sphi 0, %s44
      %s64 = sphi 0, %s64
      %s66 = sphi 0, %s64
      %s67 = sphi 0, %s66
      %s81 = sphi 0, %s67
      %s85 = sphi 0, %s85
      %s87 = sphi 0, %s85
      %s88 = sphi 0, %s87
      %s102 = sphi 0, %s88
      %s106 = sphi 0, %s106
      %s108 = sphi 0, %s106
      %s109 = sphi 0, %s108
      %s123 = sphi 0, %s109
      %s127 = sphi 0, %s127
      %s129 = sphi 0, %s127
      %s130 = sphi 0, %s129
      %s144 = sphi 0, %s130
      %s148 = sphi 0, %s148
      %s150 = sphi 0, %s148
      %s151 = sphi 0, %s150
      %s165 = sphi 0, %s151
      %s169 = sphi 0, %s169
      %s171 = sphi 0, %s169
      %s172 = sphi 0, %s171
      %s186 = sphi 0, %s172
      %s194 = sphi 0, %s196
      %s197 = sphi 0, %s194
      %s198 = sphi 0, %s197
      %s214 = sphi 0, %s198
    $region4: #{tpu_custom_call.1} parent=1 // loop_header_branch
      %19 = sbr.rel (%p17) target = $region8
    $region5: #{tpu_custom_call.1} parent=1 // loop_body
      %s21 = ssub.s32 %s16, 1
      %s22 = ssub.s32 %s16, 2
      %s29 = sadd.s32 1, %s24
      %p30 = scmp.ge.s32.totalorder %s29, 3
      %s31 = scalar_select %p30, 0, %s29
      %s32 = sadd.s32 1, %s23
      %s33 = scalar_select %p30, %s32, %s23
      %p34 = scmp.ge.s32.totalorder %s33, 2
      %s35 = scalar_select %p34, 0, %s33
      %s36 = ssub.s32 %s23, %s35
      %s37 = ssub.s32 %s24, %s31
      %s38 = sor.u32 %s36, %s37
      %p39 = scmp.eq.s32.totalorder %s38, 0
      %s41 = sadd.s32 %s40, 1
      %s42 = scalar_select %p39, %s40, %s41
      %p45 = pneg %p39
      %p46 = scmp.eq.s32.totalorder %s16, 5
      %p47 = por %p45, %p46
      %p48 = scmp.ne.s32.totalorder %s40, %s43
      %p49 = scmp.eq.s32.totalorder %s16, 0
      %p50 = por %p48, %p49
      %p51 = scmp.ne.s32.totalorder %s40, %s43
      %p52 = scmp.eq.s32.totalorder %s21, 5
      %p53 = por %p51, %p52
      %p54 = scmp.ne.s32.totalorder %s43, %s44
      %p55 = scmp.eq.s32.totalorder %s21, 0
      %p56 = por %p54, %p55
      %p57 = scmp.ne.s32.totalorder %s43, %s44
      %p58 = scmp.eq.s32.totalorder %s22, 5
      %p59 = por %p57, %p58
      %p61 = scmp.ne.s32.totalorder %s44, %s60
      %p62 = scmp.eq.s32.totalorder %s22, 0
      %p63 = por %p61, %p62
      %s65 = sadd.s32 %s64, 1
      %p68 = scmp.eq.s32.totalorder %s16, 5
      %p69 = scmp.ne.s32.totalorder %s64, %s66
      %p70 = scmp.eq.s32.totalorder %s16, 0
      %p71 = por %p69, %p70
      %p72 = scmp.ne.s32.totalorder %s64, %s66
      %p73 = scmp.eq.s32.totalorder %s21, 5
      %p74 = por %p72, %p73
      %p75 = scmp.ne.s32.totalorder %s66, %s67
      %p76 = scmp.eq.s32.totalorder %s21, 0
      %p77 = por %p75, %p76
      %p78 = scmp.ne.s32.totalorder %s66, %s67
      %p79 = scmp.eq.s32.totalorder %s22, 5
      %p80 = por %p78, %p79
      %p82 = scmp.ne.s32.totalorder %s67, %s81
      %p83 = scmp.eq.s32.totalorder %s22, 0
      %p84 = por %p82, %p83
      %s86 = sadd.s32 %s85, 1
      %p89 = scmp.eq.s32.totalorder %s16, 5
      %p90 = scmp.ne.s32.totalorder %s85, %s87
      %p91 = scmp.eq.s32.totalorder %s16, 0
      %p92 = por %p90, %p91
      %p93 = scmp.ne.s32.totalorder %s85, %s87
      %p94 = scmp.eq.s32.totalorder %s21, 5
      %p95 = por %p93, %p94
      %p96 = scmp.ne.s32.totalorder %s87, %s88
      %p97 = scmp.eq.s32.totalorder %s21, 0
      %p98 = por %p96, %p97
      %p99 = scmp.ne.s32.totalorder %s87, %s88
      %p100 = scmp.eq.s32.totalorder %s22, 5
      %p101 = por %p99, %p100
      %p103 = scmp.ne.s32.totalorder %s88, %s102
      %p104 = scmp.eq.s32.totalorder %s22, 0
      %p105 = por %p103, %p104
      %s107 = sadd.s32 %s106, 1
      %p110 = scmp.eq.s32.totalorder %s16, 5
      %p111 = scmp.ne.s32.totalorder %s106, %s108
      %p112 = scmp.eq.s32.totalorder %s16, 0
      %p113 = por %p111, %p112
      %p114 = scmp.ne.s32.totalorder %s106, %s108
      %p115 = scmp.eq.s32.totalorder %s21, 5
      %p116 = por %p114, %p115
      %p117 = scmp.ne.s32.totalorder %s108, %s109
      %p118 = scmp.eq.s32.totalorder %s21, 0
      %p119 = por %p117, %p118
      %p120 = scmp.ne.s32.totalorder %s108, %s109
      %p121 = scmp.eq.s32.totalorder %s22, 5
      %p122 = por %p120, %p121
      %p124 = scmp.ne.s32.totalorder %s109, %s123
      %p125 = scmp.eq.s32.totalorder %s22, 0
      %p126 = por %p124, %p125
      %s128 = sadd.s32 %s127, 1
      %p131 = scmp.eq.s32.totalorder %s16, 5
      %p132 = scmp.ne.s32.totalorder %s127, %s129
      %p133 = scmp.eq.s32.totalorder %s16, 0
      %p134 = por %p132, %p133
      %p135 = scmp.ne.s32.totalorder %s127, %s129
      %p136 = scmp.eq.s32.totalorder %s21, 5
      %p137 = por %p135, %p136
      %p138 = scmp.ne.s32.totalorder %s129, %s130
      %p139 = scmp.eq.s32.totalorder %s21, 0
      %p140 = por %p138, %p139
      %p141 = scmp.ne.s32.totalorder %s129, %s130
      %p142 = scmp.eq.s32.totalorder %s22, 5
      %p143 = por %p141, %p142
      %p145 = scmp.ne.s32.totalorder %s130, %s144
      %p146 = scmp.eq.s32.totalorder %s22, 0
      %p147 = por %p145, %p146
      %s149 = sadd.s32 %s148, 1
      %p152 = scmp.eq.s32.totalorder %s16, 5
      %p153 = scmp.ne.s32.totalorder %s148, %s150
      %p154 = scmp.eq.s32.totalorder %s16, 0
      %p155 = por %p153, %p154
      %p156 = scmp.ne.s32.totalorder %s148, %s150
      %p157 = scmp.eq.s32.totalorder %s21, 5
      %p158 = por %p156, %p157
      %p159 = scmp.ne.s32.totalorder %s150, %s151
      %p160 = scmp.eq.s32.totalorder %s21, 0
      %p161 = por %p159, %p160
      %p162 = scmp.ne.s32.totalorder %s150, %s151
      %p163 = scmp.eq.s32.totalorder %s22, 5
      %p164 = por %p162, %p163
      %p166 = scmp.ne.s32.totalorder %s151, %s165
      %p167 = scmp.eq.s32.totalorder %s22, 0
      %p168 = por %p166, %p167
      %s170 = sadd.s32 %s169, 1
      %p173 = scmp.eq.s32.totalorder %s16, 5
      %p174 = scmp.ne.s32.totalorder %s169, %s171
      %p175 = scmp.eq.s32.totalorder %s16, 0
      %p176 = por %p174, %p175
      %p177 = scmp.ne.s32.totalorder %s169, %s171
      %p178 = scmp.eq.s32.totalorder %s21, 5
      %p179 = por %p177, %p178
      %p180 = scmp.ne.s32.totalorder %s171, %s172
      %p181 = scmp.eq.s32.totalorder %s21, 0
      %p182 = por %p180, %p181
      %p183 = scmp.ne.s32.totalorder %s171, %s172
      %p184 = scmp.eq.s32.totalorder %s22, 5
      %p185 = por %p183, %p184
      %p187 = scmp.ne.s32.totalorder %s172, %s186
      %p188 = scmp.eq.s32.totalorder %s22, 0
      %p189 = por %p187, %p188
      %s190 = ssub.s32 %s23, %s35
      %s191 = ssub.s32 %s24, %s31
      %s192 = sor.u32 %s190, %s191
      %p193 = scmp.eq.s32.totalorder %s192, 0
      %s195 = sadd.s32 %s194, 1
      %s196 = scalar_select %p193, %s194, %s195
      %p199 = pneg %p193
      %p200 = scmp.eq.s32.totalorder %s16, 5
      %p201 = por %p199, %p200
      %p202 = scmp.ne.s32.totalorder %s194, %s197
      %p203 = scmp.eq.s32.totalorder %s16, 0
      %p204 = por %p202, %p203
      %p205 = scmp.ne.s32.totalorder %s194, %s197
      %p206 = scmp.eq.s32.totalorder %s21, 5
      %p207 = por %p205, %p206
      %p208 = scmp.ne.s32.totalorder %s197, %s198
      %p209 = scmp.eq.s32.totalorder %s21, 0
      %p210 = por %p208, %p209
      %p211 = scmp.ne.s32.totalorder %s197, %s198
      %p212 = scmp.eq.s32.totalorder %s22, 5
      %p213 = por %p211, %p212
      %p215 = scmp.ne.s32.totalorder %s198, %s214
      %p216 = scmp.eq.s32.totalorder %s22, 0
      %p217 = por %p215, %p216
      %p218 = scmp.le.s32.totalorder 1, %s16
      %p219 = scmp.lt.s32.totalorder %s16, 7
      %p220 = pnand %p218, %p219
      %p221 = pneg %p220
      // Predicated region
      $region9: #{tpu_custom_call.1} parent=5 // pred_check
        _
      $region10: #{tpu_custom_call.1} parent=5 // pred_check_branch
        %223 = sbr.rel (%p220) target = $region12
      $region11: #{tpu_custom_call.1} parent=5 // pred_region
        %s224 = ssub.s32 %s16, 1
        // Predicated region
        $region13: #{tpu_custom_call.1} parent=11 // pred_check
          %p225 = pneg %p77
        $region14: #{tpu_custom_call.1} parent=11 // pred_check_branch
          %227 = sbr.rel (%p225) target = $region16
        $region15: #{tpu_custom_call.1} parent=11 // pred_region
          _
        $region16: #{tpu_custom_call.1} parent=11 // pred_fallthru
          _
        // Predicated region
        $region17: #{tpu_custom_call.1} parent=11 // pred_check
          %p228 = pneg %p98
        $region18: #{tpu_custom_call.1} parent=11 // pred_check_branch
          %230 = sbr.rel (%p228) target = $region20
        $region19: #{tpu_custom_call.1} parent=11 // pred_region
          _
        $region20: #{tpu_custom_call.1} parent=11 // pred_fallthru
          _
        // Predicated region
        $region21: #{tpu_custom_call.1} parent=11 // pred_check
          %p231 = pneg %p119
        $region22: #{tpu_custom_call.1} parent=11 // pred_check_branch
          %233 = sbr.rel (%p231) target = $region24
        $region23: #{tpu_custom_call.1} parent=11 // pred_region
          _
        $region24: #{tpu_custom_call.1} parent=11 // pred_fallthru
          _
        // Predicated region
        $region25: #{tpu_custom_call.1} parent=11 // pred_check
          %p234 = pneg %p140
        $region26: #{tpu_custom_call.1} parent=11 // pred_check_branch
          %236 = sbr.rel (%p234) target = $region28
        $region27: #{tpu_custom_call.1} parent=11 // pred_region
          _
        $region28: #{tpu_custom_call.1} parent=11 // pred_fallthru
          _
        // Predicated region
        $region29: #{tpu_custom_call.1} parent=11 // pred_check
          %p237 = pneg %p161
        $region30: #{tpu_custom_call.1} parent=11 // pred_check_branch
          %239 = sbr.rel (%p237) target = $region32
        $region31: #{tpu_custom_call.1} parent=11 // pred_region
          _
        $region32: #{tpu_custom_call.1} parent=11 // pred_fallthru
          _
        // Predicated region
        $region33: #{tpu_custom_call.1} parent=11 // pred_check
          %p240 = pneg %p182
        $region34: #{tpu_custom_call.1} parent=11 // pred_check_branch
          %242 = sbr.rel (%p240) target = $region36
        $region35: #{tpu_custom_call.1} parent=11 // pred_region
          _
        $region36: #{tpu_custom_call.1} parent=11 // pred_fallthru
          _
      $region12: #{tpu_custom_call.1} parent=5 // pred_fallthru
        _
      %p243 = scmp.lt.s32.totalorder %s16, 6
      // Predicated region
      $region37: #{tpu_custom_call.1} parent=5 // pred_check
        %p244 = pneg %p243
      $region38: #{tpu_custom_call.1} parent=5 // pred_check_branch
        %246 = sbr.rel (%p244) target = $region40
      $region39: #{tpu_custom_call.1} parent=5 // pred_region
        // Predicated region
        $region41: #{tpu_custom_call.1} parent=39 // pred_check
          %p247 = pneg %p50
        $region42: #{tpu_custom_call.1} parent=39 // pred_check_branch
          %249 = sbr.rel (%p247) target = $region44
        $region43: #{tpu_custom_call.1} parent=39 // pred_region
          %p250 = scmp.lt.s32.totalorder %s23, 1
          %s251 = scalar_select %p250, %s23, 1
          %p252 = scmp.lt.s32.totalorder %s24, 2
          %s253 = scalar_select %p252, %s24, 2
          %s254 = smul.addr %s251, 3
          %s255 = sadd.s32 %s253, %s254
          %s256 = smul.addr %s255, 4
          %s257 = scalar_lea.vmem %s0, %s256
        $region44: #{tpu_custom_call.1} parent=39 // pred_fallthru
          _
      $region40: #{tpu_custom_call.1} parent=5 // pred_fallthru
        _
      %p258 = scmp.le.s32.totalorder 1, %s16
      %p259 = scmp.lt.s32.totalorder %s16, 7
      %p260 = pnand %p258, %p259
      %p261 = pneg %p260
      // Predicated region
      $region45: #{tpu_custom_call.1} parent=5 // pred_check
        _
      $region46: #{tpu_custom_call.1} parent=5 // pred_check_branch
        %263 = sbr.rel (%p260) target = $region48
      $region47: #{tpu_custom_call.1} parent=5 // pred_region
        %s264 = ssub.s32 %s16, 1
        %p265 = scmp.lt.s32.totalorder %s25, 1
        %s266 = scalar_select %p265, %s25, 1
        %p267 = scmp.lt.s32.totalorder %s26, 2
        %s268 = scalar_select %p267, %s26, 2
        %s269 = smul.addr %s266, 3
        %s270 = sadd.s32 %s268, %s269
        %s271 = smul.addr %s270, 4
        %s272 = scalar_lea.vmem %s0, %s271
        %p273 = pneg %p56
        %p274 = pneg %p53
        %p275 = pneg %p77
        %p276 = pneg %p74
        %p277 = pneg %p98
        %p278 = pneg %p95
        %p279 = pneg %p119
        %p280 = pneg %p116
        %p281 = pneg %p140
        %p282 = pneg %p137
        %p283 = pneg %p161
        %p284 = pneg %p158
        %p285 = pneg %p182
        %p286 = pneg %p179
        %p287 = pneg %p210
        %p288 = pneg %p207
        %s289 = sand.u32 %s197, 1
        %s290 = scalar_lea.sflag [#allocation5], %s289
        %s291 = sand.u32 %s197, 1
        %s292 = smul.addr %s291, 8
        %s293 = scalar_lea.vmem [#allocation4], %s292
        %p294 = scmp.lt.s32.totalorder %s25, 1
        %s295 = scalar_select %p294, %s25, 1
        %p296 = scmp.lt.s32.totalorder %s26, 2
        %s297 = scalar_select %p296, %s26, 2
        %s298 = smul.addr %s295, 3
        %s299 = sadd.s32 %s297, %s298
        %s300 = smul.addr %s299, 4
        %s301 = scalar_lea.vmem %s0, %s300
        %p302 = scmp.eq.s32.totalorder %s26, 0
        // Predicated region
        $region49: #{tpu_custom_call.1} parent=47 // pred_check
          %p303 = pneg %p302
        $region50: #{tpu_custom_call.1} parent=47 // pred_check_branch
          %305 = sbr.rel (%p303) target = $region52
        $region51: #{tpu_custom_call.1} parent=47 // pred_region
          %vm306 = vcmask 27648
          %307 = vst.msk [vmem:[#allocation2] sm:$0xf] %vm306, 0.0
          %vm308 = vcmask 31744
          %309 = vst.msk [vmem:[#allocation3] sm:$0xff] %vm308, 0.0
        $region52: #{tpu_custom_call.1} parent=47 // pred_fallthru
          _
        %v310 = vld [vmem:[%s301] sm:$0xf]
        %312 = vrot.lane.b32.xlu0 %v310, 4
        %v313 = vpop.permute.xlu0 %312
        %v314 = vrot.slane %v313, 4
        %vm315 = vcmask 31744
        %v316 = vsel %vm315, %v314, %v313
        %vm318 = vcmask 1043488
        %vm319 = vcmask 31748
        %vm320 = vmor %vm319, %vm318
        %321 = vst.msk [vmem:[#allocation2] sm:$0xff] %vm320, %v316
        %v322 = vld [vmem:[#allocation2] sm:$0xf]
        %v323 = vld [vmem:[%s1] sm:$0xff]
        %v324 = vld [vmem:[#allocation2] sm:$0xff]
        %s325 = scalar_lea.vmem %s1, 8
        %v326 = vld [vmem:[%s325] sm:$0xff]
        %v328 = vcombine.high %v324, %v324
        %329 = vrot.lane.b32.xlu0 %v324, 126
        %v330 = vpop.permute.xlu0 %329
        %331 = vrot.lane.b32.xlu0 %v328, 126
        %v332 = vpop.permute.xlu0 %331
        %vm333 = vcmask 1031168
        %v334 = vsel %vm333, %v330, %v332
        %v336 = vsel %vm315, %v326, 0
        %vm338 = vcmask 1043456
        %v339 = vsel %vm338, %v334, 0
        %341 = vmatprep.subr.mxu0 0.0
        %342 = vmatpush1.msra.mxu0 %v339
        %343 = vmatprep.subr.mxu0 0.0
        %344 = vmatpush1.msra.mxu0 0.0
        %345 = vmatprep.subr.mxu0 0.0
        %346 = vmatpush1.msra.mxu0 0.0
        %347 = vmatprep.subr.mxu0 0.0
        %348 = vmatpush1.msra.mxu0 0.0
        %349 = vmatprep.subr.mxu0 0.0
        %350 = vmatpush1.msra.mxu0 0.0
        %351 = vmatprep.subr.mxu0 0.0
        %352 = vmatpush1.msra.mxu0 0.0
        %353 = vmatprep.subr.mxu0 0.0
        %354 = vmatpush1.msra.mxu0 0.0
        %355 = vmatprep.subr.mxu0 0.0
        %356 = vmatpush1.msra.mxu0 0.0
        %357 = vmatprep.subr.mxu0 0.0
        %358 = vmatpush1.msra.mxu0 0.0
        %359 = vmatprep.subr.mxu0 0.0
        %360 = vmatpush1.msra.mxu0 0.0
        %361 = vmatprep.subr.mxu0 0.0
        %362 = vmatpush1.msra.mxu0 0.0
        %363 = vmatprep.subr.mxu0 0.0
        %364 = vmatpush1.msra.mxu0 0.0
        %365 = vmatprep.subr.mxu0 0.0
        %366 = vmatpush1.msra.mxu0 0.0
        %367 = vmatprep.subr.mxu0 0.0
        %368 = vmatpush1.msra.mxu0 0.0
        %369 = vmatprep.subr.mxu0 0.0
        %370 = vmatpush1.msra.mxu0 0.0
        %371 = vmatprep.subr.mxu0 0.0
        %372 = vmatpush1.msra.mxu0 0.0
        %373 = vmatprep.subr.mxu0 0.0
        %374 = vmatpush1.msra.mxu0 0.0
        %375 = vmatprep.subr.mxu0 0.0
        %376 = vmatpush1.msra.mxu0 0.0
        %377 = vmatprep.subr.mxu0 0.0
        %378 = vmatpush1.msra.mxu0 0.0
        %379 = vmatprep.subr.mxu0 0.0
        %380 = vmatpush1.msra.mxu0 0.0
        %381 = vmatprep.subr.mxu0 0.0
        %382 = vmatpush1.msra.mxu0 0.0
        %383 = vmatprep.subr.mxu0 0.0
        %384 = vmatpush1.msra.mxu0 0.0
        %385 = vmatprep.subr.mxu0 0.0
        %386 = vmatpush1.msra.mxu0 0.0
        %387 = vmatprep.subr.mxu0 0.0
        %388 = vmatpush1.msra.mxu0 0.0
        %389 = vmatprep.subr.mxu0 0.0
        %390 = vmatpush1.msra.mxu0 0.0
        %391 = vmatprep.subr.mxu0 0.0
        %392 = vmatpush1.msra.mxu0 0.0
        %393 = vmatprep.subr.mxu0 0.0
        %394 = vmatpush1.msra.mxu0 0.0
        %395 = vmatprep.subr.mxu0 0.0
        %396 = vmatpush1.msra.mxu0 0.0
        %397 = vmatprep.subr.mxu0 0.0
        %398 = vmatpush1.msra.mxu0 0.0
        %399 = vmatprep.subr.mxu0 0.0
        %400 = vmatpush1.msra.mxu0 0.0
        %401 = vmatprep.subr.mxu0 0.0
        %402 = vmatpush1.msra.mxu0 0.0
        %403 = vmatprep.subr.mxu0 0.0
        %404 = vmatpush1.msra.mxu0 0.0
        %405 = vmatprep.mubr.f32.mxu0 0.0
        %406 = vmatmul.mubr.f32.gmra.mrb[0].mxu0 %v336
        %v407 = vpop.f32.mrb[0].mxu0
        %v408 = vadd.f32 0.0, %v407
        %v409 = vpop.f32.mrb[0].mxu0
        %410 = vdwg.mxu0
        %v412 = vsel %vm315, %v323, 0
        %v415 = vsel %vm338, %v322, 0
        %417 = vmatprep.subr.mxu0 0.0
        %418 = vmatpush1.msra.mxu0 %v415
        %419 = vmatprep.subr.mxu0 0.0
        %420 = vmatpush1.msra.mxu0 0.0
        %421 = vmatprep.subr.mxu0 0.0
        %422 = vmatpush1.msra.mxu0 0.0
        %423 = vmatprep.subr.mxu0 0.0
        %424 = vmatpush1.msra.mxu0 0.0
        %425 = vmatprep.subr.mxu0 0.0
        %426 = vmatpush1.msra.mxu0 0.0
        %427 = vmatprep.subr.mxu0 0.0
        %428 = vmatpush1.msra.mxu0 0.0
        %429 = vmatprep.subr.mxu0 0.0
        %430 = vmatpush1.msra.mxu0 0.0
        %431 = vmatprep.subr.mxu0 0.0
        %432 = vmatpush1.msra.mxu0 0.0
        %433 = vmatprep.subr.mxu0 0.0
        %434 = vmatpush1.msra.mxu0 0.0
        %435 = vmatprep.subr.mxu0 0.0
        %436 = vmatpush1.msra.mxu0 0.0
        %437 = vmatprep.subr.mxu0 0.0
        %438 = vmatpush1.msra.mxu0 0.0
        %439 = vmatprep.subr.mxu0 0.0
        %440 = vmatpush1.msra.mxu0 0.0
        %441 = vmatprep.subr.mxu0 0.0
        %442 = vmatpush1.msra.mxu0 0.0
        %443 = vmatprep.subr.mxu0 0.0
        %444 = vmatpush1.msra.mxu0 0.0
        %445 = vmatprep.subr.mxu0 0.0
        %446 = vmatpush1.msra.mxu0 0.0
        %447 = vmatprep.subr.mxu0 0.0
        %448 = vmatpush1.msra.mxu0 0.0
        %449 = vmatprep.subr.mxu0 0.0
        %450 = vmatpush1.msra.mxu0 0.0
        %451 = vmatprep.subr.mxu0 0.0
        %452 = vmatpush1.msra.mxu0 0.0
        %453 = vmatprep.subr.mxu0 0.0
        %454 = vmatpush1.msra.mxu0 0.0
        %455 = vmatprep.subr.mxu0 0.0
        %456 = vmatpush1.msra.mxu0 0.0
        %457 = vmatprep.subr.mxu0 0.0
        %458 = vmatpush1.msra.mxu0 0.0
        %459 = vmatprep.subr.mxu0 0.0
        %460 = vmatpush1.msra.mxu0 0.0
        %461 = vmatprep.subr.mxu0 0.0
        %462 = vmatpush1.msra.mxu0 0.0
        %463 = vmatprep.subr.mxu0 0.0
        %464 = vmatpush1.msra.mxu0 0.0
        %465 = vmatprep.subr.mxu0 0.0
        %466 = vmatpush1.msra.mxu0 0.0
        %467 = vmatprep.subr.mxu0 0.0
        %468 = vmatpush1.msra.mxu0 0.0
        %469 = vmatprep.subr.mxu0 0.0
        %470 = vmatpush1.msra.mxu0 0.0
        %471 = vmatprep.subr.mxu0 0.0
        %472 = vmatpush1.msra.mxu0 0.0
        %473 = vmatprep.subr.mxu0 0.0
        %474 = vmatpush1.msra.mxu0 0.0
        %475 = vmatprep.subr.mxu0 0.0
        %476 = vmatpush1.msra.mxu0 0.0
        %477 = vmatprep.subr.mxu0 0.0
        %478 = vmatpush1.msra.mxu0 0.0
        %479 = vmatprep.subr.mxu0 0.0
        %480 = vmatpush1.msra.mxu0 0.0
        %481 = vmatprep.mubr.f32.mxu0 0.0
        %482 = vmatmul.mubr.f32.gmra.mrb[0].mxu0 %v412
        %v483 = vpop.f32.mrb[0].mxu0
        %v484 = vadd.f32 %v408, %v483
        %v485 = vpop.f32.mrb[0].mxu0
        %486 = vdwg.mxu0
        %v487 = vld [vmem:[#allocation2] sm:$0xff]
        %s488 = scalar_lea.vmem %s1, 16
        %v489 = vld [vmem:[%s488] sm:$0xff]
        %v491 = vcombine.high %v487, %v487
        %492 = vrot.lane.b32.xlu0 %v487, 124
        %v493 = vpop.permute.xlu0 %492
        %494 = vrot.lane.b32.xlu0 %v491, 124
        %v495 = vpop.permute.xlu0 %494
        %vm496 = vcmask 1014784
        %v497 = vsel %vm496, %v493, %v495
        %v499 = vsel %vm315, %v489, 0
        %v501 = vsel %vm338, %v497, 0
        %503 = vmatprep.subr.mxu0 0.0
        %504 = vmatpush1.msra.mxu0 %v501
        %505 = vmatprep.subr.mxu0 0.0
        %506 = vmatpush1.msra.mxu0 0.0
        %507 = vmatprep.subr.mxu0 0.0
        %508 = vmatpush1.msra.mxu0 0.0
        %509 = vmatprep.subr.mxu0 0.0
        %510 = vmatpush1.msra.mxu0 0.0
        %511 = vmatprep.subr.mxu0 0.0
        %512 = vmatpush1.msra.mxu0 0.0
        %513 = vmatprep.subr.mxu0 0.0
        %514 = vmatpush1.msra.mxu0 0.0
        %515 = vmatprep.subr.mxu0 0.0
        %516 = vmatpush1.msra.mxu0 0.0
        %517 = vmatprep.subr.mxu0 0.0
        %518 = vmatpush1.msra.mxu0 0.0
        %519 = vmatprep.subr.mxu0 0.0
        %520 = vmatpush1.msra.mxu0 0.0
        %521 = vmatprep.subr.mxu0 0.0
        %522 = vmatpush1.msra.mxu0 0.0
        %523 = vmatprep.subr.mxu0 0.0
        %524 = vmatpush1.msra.mxu0 0.0
        %525 = vmatprep.subr.mxu0 0.0
        %526 = vmatpush1.msra.mxu0 0.0
        %527 = vmatprep.subr.mxu0 0.0
        %528 = vmatpush1.msra.mxu0 0.0
        %529 = vmatprep.subr.mxu0 0.0
        %530 = vmatpush1.msra.mxu0 0.0
        %531 = vmatprep.subr.mxu0 0.0
        %532 = vmatpush1.msra.mxu0 0.0
        %533 = vmatprep.subr.mxu0 0.0
        %534 = vmatpush1.msra.mxu0 0.0
        %535 = vmatprep.subr.mxu0 0.0
        %536 = vmatpush1.msra.mxu0 0.0
        %537 = vmatprep.subr.mxu0 0.0
        %538 = vmatpush1.msra.mxu0 0.0
        %539 = vmatprep.subr.mxu0 0.0
        %540 = vmatpush1.msra.mxu0 0.0
        %541 = vmatprep.subr.mxu0 0.0
        %542 = vmatpush1.msra.mxu0 0.0
        %543 = vmatprep.subr.mxu0 0.0
        %544 = vmatpush1.msra.mxu0 0.0
        %545 = vmatprep.subr.mxu0 0.0
        %546 = vmatpush1.msra.mxu0 0.0
        %547 = vmatprep.subr.mxu0 0.0
        %548 = vmatpush1.msra.mxu0 0.0
        %549 = vmatprep.subr.mxu0 0.0
        %550 = vmatpush1.msra.mxu0 0.0
        %551 = vmatprep.subr.mxu0 0.0
        %552 = vmatpush1.msra.mxu0 0.0
        %553 = vmatprep.subr.mxu0 0.0
        %554 = vmatpush1.msra.mxu0 0.0
        %555 = vmatprep.subr.mxu0 0.0
        %556 = vmatpush1.msra.mxu0 0.0
        %557 = vmatprep.subr.mxu0 0.0
        %558 = vmatpush1.msra.mxu0 0.0
        %559 = vmatprep.subr.mxu0 0.0
        %560 = vmatpush1.msra.mxu0 0.0
        %561 = vmatprep.subr.mxu0 0.0
        %562 = vmatpush1.msra.mxu0 0.0
        %563 = vmatprep.subr.mxu0 0.0
        %564 = vmatpush1.msra.mxu0 0.0
        %565 = vmatprep.subr.mxu0 0.0
        %566 = vmatpush1.msra.mxu0 0.0
        %567 = vmatprep.mubr.f32.mxu0 0.0
        %568 = vmatmul.mubr.f32.gmra.mrb[0].mxu0 %v499
        %v569 = vpop.f32.mrb[0].mxu0
        %v570 = vadd.f32 0.0, %v569
        %v571 = vpop.f32.mrb[0].mxu0
        %572 = vdwg.mxu0
        %v573 = vadd.f32 %v484, %v570
        %v574 = vld [vmem:[%s2] sm:$0xff]
        %576 = vset.pattern.permute.xlu0 0
        %577 = vperm.xlu0 %576, %v574
        %v578 = vpop.permute.xlu0 %577
        %v580 = vadd.f32 %v573, %v578
        %v581 = vmax.f32 %v580, 0.0
        %583 = vrot.lane.b32.xlu0 %v581, 4
        %v584 = vpop.permute.xlu0 %583
        %vm586 = vcmask 1047584
        %587 = vst.msk [vmem:[#allocation3] sm:$0xff] %vm586, %v584
        %588 = vst.msk [vmem:[#allocation3 + $0x8] sm:$0xff] %vm315, %v584
        %v589 = vld [vmem:[#allocation3] sm:$0xff]
        %v590 = vld [vmem:[%s3] sm:$0xff]
        %v591 = vld [vmem:[#allocation3 + $0x8] sm:$0xff]
        %s592 = scalar_lea.vmem %s3, 8
        %v593 = vld [vmem:[%s592] sm:$0xff]
        %596 = vrot.lane.b32.xlu0 %v589, 126
        %v597 = vpop.permute.xlu0 %596
        %598 = vrot.lane.b32.xlu0 %v591, 126
        %v599 = vpop.permute.xlu0 %598
        %v600 = vsel %vm333, %v597, %v599
        %vm602 = vcmask 64512
        %v604 = vsel %vm602, %v593, 0
        %606 = vmatprep.subr.mxu0 0.0
        %607 = vmatpush1.msra.mxu0 %v600
        %608 = vmatprep.subr.mxu0 0.0
        %609 = vmatpush1.msra.mxu0 0.0
        %610 = vmatprep.subr.mxu0 0.0
        %611 = vmatpush1.msra.mxu0 0.0
        %612 = vmatprep.subr.mxu0 0.0
        %613 = vmatpush1.msra.mxu0 0.0
        %614 = vmatprep.subr.mxu0 0.0
        %615 = vmatpush1.msra.mxu0 0.0
        %616 = vmatprep.subr.mxu0 0.0
        %617 = vmatpush1.msra.mxu0 0.0
        %618 = vmatprep.subr.mxu0 0.0
        %619 = vmatpush1.msra.mxu0 0.0
        %620 = vmatprep.subr.mxu0 0.0
        %621 = vmatpush1.msra.mxu0 0.0
        %622 = vmatprep.subr.mxu0 0.0
        %623 = vmatpush1.msra.mxu0 0.0
        %624 = vmatprep.subr.mxu0 0.0
        %625 = vmatpush1.msra.mxu0 0.0
        %626 = vmatprep.subr.mxu0 0.0
        %627 = vmatpush1.msra.mxu0 0.0
        %628 = vmatprep.subr.mxu0 0.0
        %629 = vmatpush1.msra.mxu0 0.0
        %630 = vmatprep.subr.mxu0 0.0
        %631 = vmatpush1.msra.mxu0 0.0
        %632 = vmatprep.subr.mxu0 0.0
        %633 = vmatpush1.msra.mxu0 0.0
        %634 = vmatprep.subr.mxu0 0.0
        %635 = vmatpush1.msra.mxu0 0.0
        %636 = vmatprep.subr.mxu0 0.0
        %637 = vmatpush1.msra.mxu0 0.0
        %638 = vmatprep.subr.mxu0 0.0
        %639 = vmatpush1.msra.mxu0 0.0
        %640 = vmatprep.subr.mxu0 0.0
        %641 = vmatpush1.msra.mxu0 0.0
        %642 = vmatprep.subr.mxu0 0.0
        %643 = vmatpush1.msra.mxu0 0.0
        %644 = vmatprep.subr.mxu0 0.0
        %645 = vmatpush1.msra.mxu0 0.0
        %646 = vmatprep.subr.mxu0 0.0
        %647 = vmatpush1.msra.mxu0 0.0
        %648 = vmatprep.subr.mxu0 0.0
        %649 = vmatpush1.msra.mxu0 0.0
        %650 = vmatprep.subr.mxu0 0.0
        %651 = vmatpush1.msra.mxu0 0.0
        %652 = vmatprep.subr.mxu0 0.0
        %653 = vmatpush1.msra.mxu0 0.0
        %654 = vmatprep.subr.mxu0 0.0
        %655 = vmatpush1.msra.mxu0 0.0
        %656 = vmatprep.subr.mxu0 0.0
        %657 = vmatpush1.msra.mxu0 0.0
        %658 = vmatprep.subr.mxu0 0.0
        %659 = vmatpush1.msra.mxu0 0.0
        %660 = vmatprep.subr.mxu0 0.0
        %661 = vmatpush1.msra.mxu0 0.0
        %662 = vmatprep.subr.mxu0 0.0
        %663 = vmatpush1.msra.mxu0 0.0
        %664 = vmatprep.subr.mxu0 0.0
        %665 = vmatpush1.msra.mxu0 0.0
        %666 = vmatprep.subr.mxu0 0.0
        %667 = vmatpush1.msra.mxu0 0.0
        %668 = vmatprep.subr.mxu0 0.0
        %669 = vmatpush1.msra.mxu0 0.0
        %670 = vmatprep.mubr.f32.mxu0 0.0
        %671 = vmatmul.mubr.f32.gmra.mrb[0].mxu0 %v604
        %v672 = vpop.f32.mrb[0].mxu0
        %v673 = vadd.f32 0.0, %v672
        %v674 = vpop.f32.mrb[0].mxu0
        %675 = vdwg.mxu0
        %v677 = vsel %vm602, %v590, 0
        %679 = vmatprep.subr.mxu0 0.0
        %680 = vmatpush1.msra.mxu0 %v589
        %681 = vmatprep.subr.mxu0 0.0
        %682 = vmatpush1.msra.mxu0 0.0
        %683 = vmatprep.subr.mxu0 0.0
        %684 = vmatpush1.msra.mxu0 0.0
        %685 = vmatprep.subr.mxu0 0.0
        %686 = vmatpush1.msra.mxu0 0.0
        %687 = vmatprep.subr.mxu0 0.0
        %688 = vmatpush1.msra.mxu0 0.0
        %689 = vmatprep.subr.mxu0 0.0
        %690 = vmatpush1.msra.mxu0 0.0
        %691 = vmatprep.subr.mxu0 0.0
        %692 = vmatpush1.msra.mxu0 0.0
        %693 = vmatprep.subr.mxu0 0.0
        %694 = vmatpush1.msra.mxu0 0.0
        %695 = vmatprep.subr.mxu0 0.0
        %696 = vmatpush1.msra.mxu0 0.0
        %697 = vmatprep.subr.mxu0 0.0
        %698 = vmatpush1.msra.mxu0 0.0
        %699 = vmatprep.subr.mxu0 0.0
        %700 = vmatpush1.msra.mxu0 0.0
        %701 = vmatprep.subr.mxu0 0.0
        %702 = vmatpush1.msra.mxu0 0.0
        %703 = vmatprep.subr.mxu0 0.0
        %704 = vmatpush1.msra.mxu0 0.0
        %705 = vmatprep.subr.mxu0 0.0
        %706 = vmatpush1.msra.mxu0 0.0
        %707 = vmatprep.subr.mxu0 0.0
        %708 = vmatpush1.msra.mxu0 0.0
        %709 = vmatprep.subr.mxu0 0.0
        %710 = vmatpush1.msra.mxu0 0.0
        %711 = vmatprep.subr.mxu0 0.0
        %712 = vmatpush1.msra.mxu0 0.0
        %713 = vmatprep.subr.mxu0 0.0
        %714 = vmatpush1.msra.mxu0 0.0
        %715 = vmatprep.subr.mxu0 0.0
        %716 = vmatpush1.msra.mxu0 0.0
        %717 = vmatprep.subr.mxu0 0.0
        %718 = vmatpush1.msra.mxu0 0.0
        %719 = vmatprep.subr.mxu0 0.0
        %720 = vmatpush1.msra.mxu0 0.0
        %721 = vmatprep.subr.mxu0 0.0
        %722 = vmatpush1.msra.mxu0 0.0
        %723 = vmatprep.subr.mxu0 0.0
        %724 = vmatpush1.msra.mxu0 0.0
        %725 = vmatprep.subr.mxu0 0.0
        %726 = vmatpush1.msra.mxu0 0.0
        %727 = vmatprep.subr.mxu0 0.0
        %728 = vmatpush1.msra.mxu0 0.0
        %729 = vmatprep.subr.mxu0 0.0
        %730 = vmatpush1.msra.mxu0 0.0
        %731 = vmatprep.subr.mxu0 0.0
        %732 = vmatpush1.msra.mxu0 0.0
        %733 = vmatprep.subr.mxu0 0.0
        %734 = vmatpush1.msra.mxu0 0.0
        %735 = vmatprep.subr.mxu0 0.0
        %736 = vmatpush1.msra.mxu0 0.0
        %737 = vmatprep.subr.mxu0 0.0
        %738 = vmatpush1.msra.mxu0 0.0
        %739 = vmatprep.subr.mxu0 0.0
        %740 = vmatpush1.msra.mxu0 0.0
        %741 = vmatprep.subr.mxu0 0.0
        %742 = vmatpush1.msra.mxu0 0.0
        %743 = vmatprep.mubr.f32.mxu0 0.0
        %744 = vmatmul.mubr.f32.gmra.mrb[0].mxu0 %v677
        %v745 = vpop.f32.mrb[0].mxu0
        %v746 = vadd.f32 %v673, %v745
        %v747 = vpop.f32.mrb[0].mxu0
        %748 = vdwg.mxu0
        %s749 = scalar_lea.vmem %s3, 16
        %v750 = vld [vmem:[%s749] sm:$0xff]
        %751 = vrot.lane.b32.xlu0 %v589, 124
        %v752 = vpop.permute.xlu0 %751
        %753 = vrot.lane.b32.xlu0 %v591, 124
        %v754 = vpop.permute.xlu0 %753
        %v755 = vsel %vm496, %v752, %v754
        %v758 = vsel %vm602, %v750, 0
        %760 = vmatprep.subr.mxu0 0.0
        %761 = vmatpush1.msra.mxu0 %v755
        %762 = vmatprep.subr.mxu0 0.0
        %763 = vmatpush1.msra.mxu0 0.0
        %764 = vmatprep.subr.mxu0 0.0
        %765 = vmatpush1.msra.mxu0 0.0
        %766 = vmatprep.subr.mxu0 0.0
        %767 = vmatpush1.msra.mxu0 0.0
        %768 = vmatprep.subr.mxu0 0.0
        %769 = vmatpush1.msra.mxu0 0.0
        %770 = vmatprep.subr.mxu0 0.0
        %771 = vmatpush1.msra.mxu0 0.0
        %772 = vmatprep.subr.mxu0 0.0
        %773 = vmatpush1.msra.mxu0 0.0
        %774 = vmatprep.subr.mxu0 0.0
        %775 = vmatpush1.msra.mxu0 0.0
        %776 = vmatprep.subr.mxu0 0.0
        %777 = vmatpush1.msra.mxu0 0.0
        %778 = vmatprep.subr.mxu0 0.0
        %779 = vmatpush1.msra.mxu0 0.0
        %780 = vmatprep.subr.mxu0 0.0
        %781 = vmatpush1.msra.mxu0 0.0
        %782 = vmatprep.subr.mxu0 0.0
        %783 = vmatpush1.msra.mxu0 0.0
        %784 = vmatprep.subr.mxu0 0.0
        %785 = vmatpush1.msra.mxu0 0.0
        %786 = vmatprep.subr.mxu0 0.0
        %787 = vmatpush1.msra.mxu0 0.0
        %788 = vmatprep.subr.mxu0 0.0
        %789 = vmatpush1.msra.mxu0 0.0
        %790 = vmatprep.subr.mxu0 0.0
        %791 = vmatpush1.msra.mxu0 0.0
        %792 = vmatprep.subr.mxu0 0.0
        %793 = vmatpush1.msra.mxu0 0.0
        %794 = vmatprep.subr.mxu0 0.0
        %795 = vmatpush1.msra.mxu0 0.0
        %796 = vmatprep.subr.mxu0 0.0
        %797 = vmatpush1.msra.mxu0 0.0
        %798 = vmatprep.subr.mxu0 0.0
        %799 = vmatpush1.msra.mxu0 0.0
        %800 = vmatprep.subr.mxu0 0.0
        %801 = vmatpush1.msra.mxu0 0.0
        %802 = vmatprep.subr.mxu0 0.0
        %803 = vmatpush1.msra.mxu0 0.0
        %804 = vmatprep.subr.mxu0 0.0
        %805 = vmatpush1.msra.mxu0 0.0
        %806 = vmatprep.subr.mxu0 0.0
        %807 = vmatpush1.msra.mxu0 0.0
        %808 = vmatprep.subr.mxu0 0.0
        %809 = vmatpush1.msra.mxu0 0.0
        %810 = vmatprep.subr.mxu0 0.0
        %811 = vmatpush1.msra.mxu0 0.0
        %812 = vmatprep.subr.mxu0 0.0
        %813 = vmatpush1.msra.mxu0 0.0
        %814 = vmatprep.subr.mxu0 0.0
        %815 = vmatpush1.msra.mxu0 0.0
        %816 = vmatprep.subr.mxu0 0.0
        %817 = vmatpush1.msra.mxu0 0.0
        %818 = vmatprep.subr.mxu0 0.0
        %819 = vmatpush1.msra.mxu0 0.0
        %820 = vmatprep.subr.mxu0 0.0
        %821 = vmatpush1.msra.mxu0 0.0
        %822 = vmatprep.subr.mxu0 0.0
        %823 = vmatpush1.msra.mxu0 0.0
        %824 = vmatprep.mubr.f32.mxu0 0.0
        %825 = vmatmul.mubr.f32.gmra.mrb[0].mxu0 %v758
        %v826 = vpop.f32.mrb[0].mxu0
        %v827 = vadd.f32 0.0, %v826
        %v828 = vpop.f32.mrb[0].mxu0
        %829 = vdwg.mxu0
        %v830 = vadd.f32 %v746, %v827
        %v831 = vld [vmem:[%s4] sm:$0xff]
        %833 = vset.pattern.permute.xlu0 0
        %834 = vperm.xlu0 %833, %v831
        %v835 = vpop.permute.xlu0 %834
        %v837 = vadd.f32 %v830, %v835
        %v838 = vmax.f32 %v837, 0.0
        %v839 = vld [vmem:[%s5] sm:$0xff]
        %v840 = vld [vmem:[%s6] sm:$0xff]
        %842 = vset.pattern.permute.xlu0 0
        %843 = vperm.xlu0 %842, %v840
        %v844 = vpop.permute.xlu0 %843
        %v847 = vsel %vm315, %v839, 0
        %v849 = vsel %vm338, %v310, 0
        %851 = vmatprep.subr.mxu0 0.0
        %852 = vmatpush1.msra.mxu0 %v849
        %853 = vmatprep.subr.mxu0 0.0
        %854 = vmatpush1.msra.mxu0 0.0
        %855 = vmatprep.subr.mxu0 0.0
        %856 = vmatpush1.msra.mxu0 0.0
        %857 = vmatprep.subr.mxu0 0.0
        %858 = vmatpush1.msra.mxu0 0.0
        %859 = vmatprep.subr.mxu0 0.0
        %860 = vmatpush1.msra.mxu0 0.0
        %861 = vmatprep.subr.mxu0 0.0
        %862 = vmatpush1.msra.mxu0 0.0
        %863 = vmatprep.subr.mxu0 0.0
        %864 = vmatpush1.msra.mxu0 0.0
        %865 = vmatprep.subr.mxu0 0.0
        %866 = vmatpush1.msra.mxu0 0.0
        %867 = vmatprep.subr.mxu0 0.0
        %868 = vmatpush1.msra.mxu0 0.0
        %869 = vmatprep.subr.mxu0 0.0
        %870 = vmatpush1.msra.mxu0 0.0
        %871 = vmatprep.subr.mxu0 0.0
        %872 = vmatpush1.msra.mxu0 0.0
        %873 = vmatprep.subr.mxu0 0.0
        %874 = vmatpush1.msra.mxu0 0.0
        %875 = vmatprep.subr.mxu0 0.0
        %876 = vmatpush1.msra.mxu0 0.0
        %877 = vmatprep.subr.mxu0 0.0
        %878 = vmatpush1.msra.mxu0 0.0
        %879 = vmatprep.subr.mxu0 0.0
        %880 = vmatpush1.msra.mxu0 0.0
        %881 = vmatprep.subr.mxu0 0.0
        %882 = vmatpush1.msra.mxu0 0.0
        %883 = vmatprep.subr.mxu0 0.0
        %884 = vmatpush1.msra.mxu0 0.0
        %885 = vmatprep.subr.mxu0 0.0
        %886 = vmatpush1.msra.mxu0 0.0
        %887 = vmatprep.subr.mxu0 0.0
        %888 = vmatpush1.msra.mxu0 0.0
        %889 = vmatprep.subr.mxu0 0.0
        %890 = vmatpush1.msra.mxu0 0.0
        %891 = vmatprep.subr.mxu0 0.0
        %892 = vmatpush1.msra.mxu0 0.0
        %893 = vmatprep.subr.mxu0 0.0
        %894 = vmatpush1.msra.mxu0 0.0
        %895 = vmatprep.subr.mxu0 0.0
        %896 = vmatpush1.msra.mxu0 0.0
        %897 = vmatprep.subr.mxu0 0.0
        %898 = vmatpush1.msra.mxu0 0.0
        %899 = vmatprep.subr.mxu0 0.0
        %900 = vmatpush1.msra.mxu0 0.0
        %901 = vmatprep.subr.mxu0 0.0
        %902 = vmatpush1.msra.mxu0 0.0
        %903 = vmatprep.subr.mxu0 0.0
        %904 = vmatpush1.msra.mxu0 0.0
        %905 = vmatprep.subr.mxu0 0.0
        %906 = vmatpush1.msra.mxu0 0.0
        %907 = vmatprep.subr.mxu0 0.0
        %908 = vmatpush1.msra.mxu0 0.0
        %909 = vmatprep.subr.mxu0 0.0
        %910 = vmatpush1.msra.mxu0 0.0
        %911 = vmatprep.subr.mxu0 0.0
        %912 = vmatpush1.msra.mxu0 0.0
        %913 = vmatprep.subr.mxu0 0.0
        %914 = vmatpush1.msra.mxu0 0.0
        %915 = vmatprep.mubr.f32.mxu0 0.0
        %916 = vmatmul.mubr.f32.gmra.mrb[0].mxu0 %v847
        %v917 = vpop.f32.mrb[0].mxu0
        %v918 = vadd.f32 %v844, %v917
        %v919 = vpop.f32.mrb[0].mxu0
        %920 = vdwg.mxu0
        %v921 = vadd.f32 %v838, %v918
        %v922 = vmax.f32 %v921, 0.0
        %923 = vst [vmem:[%s293] sm:$0xff] %v922
        %v924 = vld [vmem:[#allocation2 + $0x4] sm:$0xf]
        %vm925 = vcmask 27648
        %926 = vst.msk [vmem:[#allocation2] sm:$0xf] %vm925, %v924
        %v927 = vld [vmem:[#allocation3 + $0x8] sm:$0xff]
        %928 = vst.msk [vmem:[#allocation3] sm:$0xff] %vm315, %v927
        %s929 = sand.u32 %s197, 1
        %s930 = scalar_lea.sflag [#allocation5], %s929
        %s931 = sand.u32 %s197, 1
        %s932 = smul.addr %s931, 8
        %s933 = scalar_lea.vmem [#allocation4], %s932
        // Predicated region
        $region53: #{tpu_custom_call.1} parent=47 // pred_check
          %p934 = pneg %p207
        $region54: #{tpu_custom_call.1} parent=47 // pred_check_branch
          %936 = sbr.rel (%p934) target = $region56
        $region55: #{tpu_custom_call.1} parent=47 // pred_region
          %s938 = ssub.s32 128, 128
          %939 = vsyncadd %s930, %s938
          %s940 = smul.addr %s25, 3
          %s941 = sadd.s32 %s26, %s940
          %s942 = smul.addr %s941, 128
          %s943 = scalar_lea.hbm %s7, %s942
          %s945 = sshll.u32 %s933, 4
          %s946 = int_to_ptr.vmem [resolvable:$true] %s945
          %948 = dma.vmem_to_hbm [thread:$0]  %s946, 128, %s943, %s930
        $region56: #{tpu_custom_call.1} parent=47 // pred_fallthru
          _
      $region48: #{tpu_custom_call.1} parent=5 // pred_fallthru
        _
      %p949 = scmp.le.s32.totalorder 2, %s16
      // Predicated region
      $region57: #{tpu_custom_call.1} parent=5 // pred_check
        %p950 = pneg %p949
      $region58: #{tpu_custom_call.1} parent=5 // pred_check_branch
        %952 = sbr.rel (%p950) target = $region60
      $region59: #{tpu_custom_call.1} parent=5 // pred_region
        %s953 = ssub.s32 %s16, 2
        // Predicated region
        $region61: #{tpu_custom_call.1} parent=59 // pred_check
          %p954 = pneg %p213
        $region62: #{tpu_custom_call.1} parent=59 // pred_check_branch
          %956 = sbr.rel (%p954) target = $region64
        $region63: #{tpu_custom_call.1} parent=59 // pred_region
          %s957 = sand.u32 %s198, 1
          %s958 = scalar_lea.sflag [#allocation5], %s957
          %s959 = sand.u32 %s198, 1
          %s960 = smul.addr %s959, 8
          %s961 = scalar_lea.vmem [#allocation4], %s960
          %962 = dma.done %s958, 128
        $region64: #{tpu_custom_call.1} parent=59 // pred_fallthru
          _
      $region60: #{tpu_custom_call.1} parent=5 // pred_fallthru
        _
    $region6: #{tpu_custom_call.1} parent=1 // loop_footer
      %s20 = sadd.s32 1, %s16
    $region7: #{tpu_custom_call.1} parent=1 // loop_footer_branch
      %15 = sbr.rel target = $region3
    $region8: #{tpu_custom_call.1} parent=1 // loop_exit
      _
    %963 = vsyncpa [#allocation5], 1
    %s964 = scalar_lea.sflag [#allocation5], 1
    %965 = vsyncpa %s964, 1

</llo_original>
